<compile_context>
chip_gen: v5e
topology: v5e:2x2
jax: 0.10.0
libtpu: 0.0.40
codegen_flags: <defaults>
</compile_context>

<pallas_src>
import functools

import jax
import jax.numpy as jnp
from jax.experimental import pallas as pl
from jax.experimental.pallas import tpu as pltpu


def _hbd_kernel(w_ref, shift_ref, x_ref, o_ref, *, precision):
    # w_ref:     (C_out, C_in)  BN-scale-folded 1x1-conv weight (grid-resident)
    # shift_ref: (C_out, 1)     folded BN shift, f32 (grid-resident)
    # x_ref:     (C_in, TS)     input spatial tile   (lane dim = flattened H*W)
    # o_ref:     (C_out, TS)    output spatial tile  (lane dim = flattened H*W)
    y = jnp.dot(w_ref[...], x_ref[...],
                preferred_element_type=jnp.float32, precision=precision)   # MXU
    y = y + shift_ref[...]                                                 # VPU add
    o_ref[...] = jnp.maximum(y, 0.0).astype(o_ref.dtype)                   # ReLU


def _vmem_budgets():
    """(per-step block budget, vmem_limit) sized to the running TPU generation."""
    try:
        phys = int(pltpu.get_tpu_info().vmem_capacity_bytes)
    except Exception:
        phys = 64 * 1024 * 1024            # unknown chip: assume the smaller v7x VMEM
    if phys >= 96 * 1024 * 1024:           # v5e / v6e: 128 MiB VMEM per core
        return 48 * 1024 * 1024, 100 * 1024 * 1024
    return 24 * 1024 * 1024, 48 * 1024 * 1024    # v7x: 64 MiB VMEM per core


def _pick_spatial_tile(spatial, c_in, c_out, act_itemsize, w_itemsize, budget_bytes):
    """Largest lane-dense tile of the flattened H*W axis within a VMEM budget.

    Per grid step the pipeline double-buffers the (c_in, TS) input and
    (c_out, TS) output blocks, plus the grid-constant (but still
    double-buffered) weight and shift blocks.
    """
    resident = 2 * (c_out * c_in * w_itemsize + c_out * 4)      # weight + shift bufs
    avail = max(budget_bytes - resident, 512 * 1024)
    per_lane = 2 * (c_in + c_out) * act_itemsize
    cap = max(avail // per_lane, 128)
    if spatial <= cap:
        return int(spatial)                                      # full extent: legal
    # Prefer a tile that evenly divides H*W (every store is an unmasked,
    # full-width vst) and is a multiple of 128 lanes.
    n_min = -(-spatial // cap)
    for t in range(n_min, min(n_min + 64, spatial) + 1):
        ts = spatial // t
        if spatial % t == 0 and ts % 128 == 0:
            return int(ts)
    # Fallback: biggest 512-lane (else 128-lane) aligned tile; last tile masked.
    ts = (cap // 512) * 512
    if ts == 0:
        ts = (cap // 128) * 128
    return int(max(ts, 128))


def hbd_forward(x, weight, bn_gamma, bn_beta, bn_mean, bn_var, *, eps=1e-5):
    """ReLU(BatchNorm2d(Conv2d(x, weight, k=1, s=1, p=0, bias=False))), NCHW.

    The kernel is HBM-bandwidth-bound at any realistic channel count, so
    carrying x (and hence weight/output) in bf16 roughly halves wall clock.
    """
    n, c_in, h, w = x.shape
    c_out = weight.shape[0]
    assert weight.shape == (c_out, c_in)
    s = h * w

    # Fold eval-mode BN: the scale goes into the conv weight, only the shift
    # (and ReLU) remain in the kernel epilogue.
    scale_1d = (bn_gamma.astype(jnp.float32)
                / jnp.sqrt(bn_var.astype(jnp.float32) + eps))
    shift = (bn_beta.astype(jnp.float32)
             - bn_mean.astype(jnp.float32) * scale_1d).reshape(c_out, 1)
    w_scaled = (weight.astype(jnp.float32) * scale_1d[:, None]).astype(x.dtype)

    x3 = x.reshape(n, c_in, s)               # free reshape: NCHW is contiguous

    budget, vmem_limit = _vmem_budgets()
    ts = _pick_spatial_tile(s, c_in, c_out, x.dtype.itemsize,
                            w_scaled.dtype.itemsize, budget)
    s_tiles = pl.cdiv(s, ts)
    # Guarantee >= 2 "parallel" grid steps so both v7x TensorCores get work.
    if n * s_tiles < 2 and s >= 256:
        ts = (((s + 1) // 2 + 127) // 128) * 128
        s_tiles = pl.cdiv(s, ts)

    needed = (2 * (c_out * c_in * w_scaled.dtype.itemsize + c_out * 4)
              + 2 * (c_in + c_out) * ts * x.dtype.itemsize)
    vmem_limit = int(min(max(vmem_limit, needed + (4 << 20)), 128 * 1024 * 1024))

    # f32 inputs: run the MXU at full f32 precision (faithful to the conv);
    # extra MXU passes are hidden behind the HBM-bound pipeline.  bf16 inputs
    # use the native MXU path.
    precision = jax.lax.Precision.HIGHEST if x.dtype == jnp.float32 else None
    kernel = functools.partial(_hbd_kernel, precision=precision)

    # TODO(synk): sublane padding of C_in/C_out is intentionally skipped — the
    # extra HBM pad/slice copies would cost more than the packing win for this
    # bandwidth-bound op.
    out3 = pl.pallas_call(
        kernel,
        out_shape=jax.ShapeDtypeStruct((n, c_out, s), x.dtype),
        grid=(n, s_tiles),
        in_specs=[
            pl.BlockSpec((c_out, c_in), lambda b, t: (0, 0)),        # folded weight
            pl.BlockSpec((c_out, 1), lambda b, t: (0, 0)),           # BN shift
            pl.BlockSpec((pl.Squeezed(), c_in, ts), lambda b, t: (b, 0, t)),
        ],
        out_specs=pl.BlockSpec((pl.Squeezed(), c_out, ts), lambda b, t: (b, 0, t)),
        compiler_params=pltpu.CompilerParams(
            dimension_semantics=("parallel", "parallel"),
            vmem_limit_bytes=vmem_limit,
        ),
    )(w_scaled, shift, x3)

    return out3.reshape(n, c_out, h, w)


class HBD:
    """Mirror of the PyTorch HBD module: Conv1x1 (no bias) -> BatchNorm2d -> ReLU."""

    def __init__(self, in_channels, out_channels, *, key=None, eps=1e-5):
        if key is None:
            key = jax.random.PRNGKey(0)
        bound = 1.0 / (in_channels ** 0.5)
        self.weight = jax.random.uniform(
            key, (out_channels, in_channels), jnp.float32, -bound, bound)
        self.gamma = jnp.ones((out_channels,), jnp.float32)
        self.beta = jnp.zeros((out_channels,), jnp.float32)
        self.running_mean = jnp.zeros((out_channels,), jnp.float32)
        self.running_var = jnp.ones((out_channels,), jnp.float32)
        self.eps = eps

    def __call__(self, x):
        return hbd_forward(x, self.weight, self.gamma, self.beta,
                           self.running_mean, self.running_var, eps=self.eps)


def hbd_ref(x, weight, gamma, beta, mean, var, eps=1e-5):
    """Pure-JAX reference: Conv1x1 (no bias) + eval-mode BN + ReLU, NCHW."""
    y = jnp.einsum('oc,nchw->nohw', weight, x,
                   precision=jax.lax.Precision.HIGHEST)
    scale = gamma / jnp.sqrt(var + eps)
    shift = beta - mean * scale
    y = y * scale[None, :, None, None] + shift[None, :, None, None]
    return jnp.maximum(y, 0.0)


if __name__ == "__main__":
    key = jax.random.PRNGKey(0)
    k_x, k_w, k_g, k_b, k_m, k_v = jax.random.split(key, 6)

    N, C_IN, C_OUT, H, W = 2, 4, 8, 16, 16

    x = jax.random.normal(k_x, (N, C_IN, H, W), jnp.float32)
    weight = jax.random.normal(k_w, (C_OUT, C_IN), jnp.float32) * 0.5
    gamma = 1.0 + 0.1 * jax.random.normal(k_g, (C_OUT,), jnp.float32)
    beta = 0.1 * jax.random.normal(k_b, (C_OUT,), jnp.float32)
    mean = 0.1 * jax.random.normal(k_m, (C_OUT,), jnp.float32)
    var = 0.5 + jnp.abs(jax.random.normal(k_v, (C_OUT,), jnp.float32)) * 0.5

    mod = HBD(C_IN, C_OUT)
    mod.weight = weight
    mod.gamma, mod.beta = gamma, beta
    mod.running_mean, mod.running_var = mean, var

    out = jax.block_until_ready(mod(x))
    ref = hbd_ref(x, weight, gamma, beta, mean, var)

    assert out.shape == ref.shape == (N, C_OUT, H, W), (out.shape, ref.shape)
    assert out.dtype == ref.dtype
    assert bool(jnp.allclose(out, ref, atol=1e-3, rtol=1e-3)), (
        "HBD kernel mismatch vs reference; max abs diff = "
        f"{float(jnp.max(jnp.abs(out - ref)))}")

    print("KERNEL_OK")
</pallas_src>

<mosaic_0001>
module attributes {stable_mosaic.version = 11 : i64} {
  func.func @_hbd_kernel(%arg0: i32, %arg1: i32, %arg2: memref<8x4xf32, #tpu.memory_space<vmem>>, %arg3: memref<8x1xf32, #tpu.memory_space<vmem>>, %arg4: memref<1x4x256xf32, #tpu.memory_space<vmem>>, %arg5: memref<1x8x256xf32, #tpu.memory_space<vmem>>) attributes {dimension_semantics = [#tpu.dimension_semantics<parallel>, #tpu.dimension_semantics<parallel>], iteration_bounds = array<i64: 2, 1>, scalar_prefetch = 0 : i64, scratch_operands = 0 : i64, tpu.core_type = #tpu.core_type<tc>, window_params = [{pipeline_mode = #tpu.pipeline_mode<synchronous>, transform_indices = @transform_0, window_bounds = array<i64: 8, 4>}, {pipeline_mode = #tpu.pipeline_mode<synchronous>, transform_indices = @transform_1, window_bounds = array<i64: 8, 1>}, {transform_indices = @transform_2, window_bounds = array<i64: 1, 4, 256>}, {transform_indices = @transform_3, window_bounds = array<i64: 1, 8, 256>}]} {
    %c0 = arith.constant 0 : index
    %c0_0 = arith.constant 0 : index
    %0 = vector.load %arg2[%c0, %c0_0] : memref<8x4xf32, #tpu.memory_space<vmem>>, vector<8x4xf32>
    %c0_1 = arith.constant 0 : index
    %c0_2 = arith.constant 0 : index
    %c0_3 = arith.constant 0 : index
    %1 = vector.load %arg4[%c0_1, %c0_2, %c0_3] : memref<1x4x256xf32, #tpu.memory_space<vmem>>, vector<1x4x256xf32>
    %2 = vector.shape_cast %1 : vector<1x4x256xf32> to vector<4x256xf32>
    %cst = arith.constant dense<0.000000e+00> : vector<8x256xf32>
    %3 = tpu.matmul %0, %2, %cst {dimension_numbers = #tpu.dot_dimension_numbers<[1], [0], [0], [1], [0, 0, 1, 1], [], []>, precision = #tpu.contract_precision<fp32>} : vector<8x4xf32>, vector<4x256xf32>, vector<8x256xf32> -> vector<8x256xf32>
    %c0_4 = arith.constant 0 : index
    %c0_5 = arith.constant 0 : index
    %4 = vector.load %arg3[%c0_4, %c0_5] : memref<8x1xf32, #tpu.memory_space<vmem>>, vector<8x1xf32>
    %5 = vector.broadcast %4 : vector<8x1xf32> to vector<8x256xf32>
    %6 = arith.addf %3, %5 : vector<8x256xf32>
    %cst_6 = arith.constant 0.000000e+00 : f32
    %7 = vector.broadcast %cst_6 : f32 to vector<8x256xf32>
    %8 = arith.maximumf %6, %7 : vector<8x256xf32>
    %c0_7 = arith.constant 0 : index
    %c0_8 = arith.constant 0 : index
    %c0_9 = arith.constant 0 : index
    %9 = vector.load %arg5[%c0_7, %c0_8, %c0_9] : memref<1x8x256xf32, #tpu.memory_space<vmem>>, vector<1x8x256xf32>
    %10 = vector.shape_cast %9 : vector<1x8x256xf32> to vector<8x256xf32>
    %11 = vector.shape_cast %8 : vector<8x256xf32> to vector<1x8x256xf32>
    tpu.vector_store %arg5[%c0_7, %c0_8, %c0_9], %11 {strides = array<i32>} : memref<1x8x256xf32, #tpu.memory_space<vmem>>, vector<1x8x256xf32>,
    return
  }
  func.func @transform_0(%arg0: i32, %arg1: i32) -> (i32, i32) {
    %c0_i32 = arith.constant 0 : i32
    %c0_i32_0 = arith.constant 0 : i32
    %c0_i32_1 = arith.constant 0 : i32
    return %c0_i32, %c0_i32_0 : i32, i32
  }
  func.func @transform_1(%arg0: i32, %arg1: i32) -> (i32, i32) {
    %c0_i32 = arith.constant 0 : i32
    %c0_i32_0 = arith.constant 0 : i32
    %c0_i32_1 = arith.constant 0 : i32
    return %c0_i32, %c0_i32_0 : i32, i32
  }
  func.func @transform_2(%arg0: i32, %arg1: i32) -> (i32, i32, i32) {
    %c0_i32 = arith.constant 0 : i32
    %c0_i32_0 = arith.constant 0 : i32
    return %arg0, %c0_i32, %arg1 : i32, i32, i32
  }
  func.func @transform_3(%arg0: i32, %arg1: i32) -> (i32, i32, i32) {
    %c0_i32 = arith.constant 0 : i32
    %c0_i32_0 = arith.constant 0 : i32
    return %arg0, %c0_i32, %arg1 : i32, i32, i32
  }
}

</mosaic_0001>

<llo_original>
// kernel: tpu_custom_call.1
$region0: #{tpu_custom_call.1}
  #allocation0 [shape = 'u32[]', space=smem, size = 0x4, offset = 0x4, fixed_abs, tag = 'smem constant byte address 0x4 - core index']
  #allocation1 [shape = 'u32[72,128]{1,0:T(1,128)}', space=vmem, size = 0x9000, scoped, tag = 'internal scratch']
  %s0 = inlined_call_operand.vmem [shape: f32[8,4], index: 0, kind: input, shape index: {}]
  %s1 = inlined_call_operand.vmem [shape: f32[8,1], index: 1, kind: input, shape index: {}]
  %s2 = inlined_call_operand.vmem [shape: f32[2,4,256], index: 2, kind: input, shape index: {}]
  %s3 = inlined_call_operand.hbm [shape: f32[2,8,256], index: 3, kind: output, shape index: {}]
  %s4 = sld [smem:[#allocation0]]
  $region45: #{tpu_custom_call.1} parent=0
    _
  %s6 = ssub.s32 1, %s4
  %s7 = scalar_select 0, %s6, %s4
  $region1: #{tpu_custom_call.1} parent=0
    #allocation2 [shape = 'u8[16384]{0}', space=vmem, size = 0x4000, scoped, tag = 'output window, operand 0']
    #allocation3 [shape = 's32[2]{0}', space=sflag, size = 0x8, scoped, tag = 'scoped memory for tpu_custom_call.1']
    %8 = vsyncpa [#allocation3], 0
    %s9 = scalar_lea.sflag [#allocation3], 1
    %10 = vsyncpa %s9, 0
    loop: start=0, step=1, limit=4
    $region2: #{tpu_custom_call.1} parent=1 // loop_pre_header
      _
    $region3: #{tpu_custom_call.1} parent=1 // loop_header
      %s12 = sphi 0, %s16
      %p13 = scmp.ge.s32.totalorder %s12, 4
      %s19 = sphi 0, %s31
      %s20 = sphi 0, %s27
      %s21 = sphi 0, %s19
      %s22 = sphi 0, %s20
      %s23 = sphi 0, %s21
      %s24 = sphi 0, %s22
      %s32 = sphi 0, %s32
      %s34 = sphi 0, %s32
      %s35 = sphi 0, %s34
      %s49 = sphi 0, %s35
      %s53 = sphi 0, %s53
      %s55 = sphi 0, %s53
      %s56 = sphi 0, %s55
      %s70 = sphi 0, %s56
      %s78 = sphi 0, %s80
      %s81 = sphi 0, %s78
      %s82 = sphi 0, %s81
      %s98 = sphi 0, %s82
      %s106 = sphi 0, %s108
      %s109 = sphi 0, %s106
      %s110 = sphi 0, %s109
      %s126 = sphi 0, %s110
    $region4: #{tpu_custom_call.1} parent=1 // loop_header_branch
      %15 = sbr.rel (%p13) target = $region8
    $region5: #{tpu_custom_call.1} parent=1 // loop_body
      %s17 = ssub.s32 %s12, 1
      %s18 = ssub.s32 %s12, 2
      %s25 = sadd.s32 1, %s20
      %p26 = scmp.ge.s32.totalorder %s25, 1
      %s27 = scalar_select %p26, 0, %s25
      %s28 = sadd.s32 1, %s19
      %s29 = scalar_select %p26, %s28, %s19
      %p30 = scmp.ge.s32.totalorder %s29, 2
      %s31 = scalar_select %p30, 0, %s29
      %s33 = sadd.s32 %s32, 1
      %p36 = scmp.eq.s32.totalorder %s12, 1
      %p37 = scmp.ne.s32.totalorder %s32, %s34
      %p38 = scmp.eq.s32.totalorder %s12, 0
      %p39 = por %p37, %p38
      %p40 = scmp.ne.s32.totalorder %s32, %s34
      %p41 = scmp.eq.s32.totalorder %s17, 1
      %p42 = por %p40, %p41
      %p43 = scmp.ne.s32.totalorder %s34, %s35
      %p44 = scmp.eq.s32.totalorder %s17, 0
      %p45 = por %p43, %p44
      %p46 = scmp.ne.s32.totalorder %s34, %s35
      %p47 = scmp.eq.s32.totalorder %s18, 1
      %p48 = por %p46, %p47
      %p50 = scmp.ne.s32.totalorder %s35, %s49
      %p51 = scmp.eq.s32.totalorder %s18, 0
      %p52 = por %p50, %p51
      %s54 = sadd.s32 %s53, 1
      %p57 = scmp.eq.s32.totalorder %s12, 1
      %p58 = scmp.ne.s32.totalorder %s53, %s55
      %p59 = scmp.eq.s32.totalorder %s12, 0
      %p60 = por %p58, %p59
      %p61 = scmp.ne.s32.totalorder %s53, %s55
      %p62 = scmp.eq.s32.totalorder %s17, 1
      %p63 = por %p61, %p62
      %p64 = scmp.ne.s32.totalorder %s55, %s56
      %p65 = scmp.eq.s32.totalorder %s17, 0
      %p66 = por %p64, %p65
      %p67 = scmp.ne.s32.totalorder %s55, %s56
      %p68 = scmp.eq.s32.totalorder %s18, 1
      %p69 = por %p67, %p68
      %p71 = scmp.ne.s32.totalorder %s56, %s70
      %p72 = scmp.eq.s32.totalorder %s18, 0
      %p73 = por %p71, %p72
      %s74 = ssub.s32 %s19, %s31
      %s75 = ssub.s32 %s20, %s27
      %s76 = sor.u32 %s74, %s75
      %p77 = scmp.eq.s32.totalorder %s76, 0
      %s79 = sadd.s32 %s78, 1
      %s80 = scalar_select %p77, %s78, %s79
      %p83 = pneg %p77
      %p84 = scmp.eq.s32.totalorder %s12, 1
      %p85 = por %p83, %p84
      %p86 = scmp.ne.s32.totalorder %s78, %s81
      %p87 = scmp.eq.s32.totalorder %s12, 0
      %p88 = por %p86, %p87
      %p89 = scmp.ne.s32.totalorder %s78, %s81
      %p90 = scmp.eq.s32.totalorder %s17, 1
      %p91 = por %p89, %p90
      %p92 = scmp.ne.s32.totalorder %s81, %s82
      %p93 = scmp.eq.s32.totalorder %s17, 0
      %p94 = por %p92, %p93
      %p95 = scmp.ne.s32.totalorder %s81, %s82
      %p96 = scmp.eq.s32.totalorder %s18, 1
      %p97 = por %p95, %p96
      %p99 = scmp.ne.s32.totalorder %s82, %s98
      %p100 = scmp.eq.s32.totalorder %s18, 0
      %p101 = por %p99, %p100
      %s102 = ssub.s32 %s19, %s31
      %s103 = ssub.s32 %s20, %s27
      %s104 = sor.u32 %s102, %s103
      %p105 = scmp.eq.s32.totalorder %s104, 0
      %s107 = sadd.s32 %s106, 1
      %s108 = scalar_select %p105, %s106, %s107
      %p111 = pneg %p105
      %p112 = scmp.eq.s32.totalorder %s12, 1
      %p113 = por %p111, %p112
      %p114 = scmp.ne.s32.totalorder %s106, %s109
      %p115 = scmp.eq.s32.totalorder %s12, 0
      %p116 = por %p114, %p115
      %p117 = scmp.ne.s32.totalorder %s106, %s109
      %p118 = scmp.eq.s32.totalorder %s17, 1
      %p119 = por %p117, %p118
      %p120 = scmp.ne.s32.totalorder %s109, %s110
      %p121 = scmp.eq.s32.totalorder %s17, 0
      %p122 = por %p120, %p121
      %p123 = scmp.ne.s32.totalorder %s109, %s110
      %p124 = scmp.eq.s32.totalorder %s18, 1
      %p125 = por %p123, %p124
      %p127 = scmp.ne.s32.totalorder %s110, %s126
      %p128 = scmp.eq.s32.totalorder %s18, 0
      %p129 = por %p127, %p128
      %p130 = scmp.le.s32.totalorder 1, %s12
      %p131 = scmp.lt.s32.totalorder %s12, 3
      %p132 = pnand %p130, %p131
      %p133 = pneg %p132
      // Predicated region
      $region9: #{tpu_custom_call.1} parent=5 // pred_check
        _
      $region10: #{tpu_custom_call.1} parent=5 // pred_check_branch
        %135 = sbr.rel (%p132) target = $region12
      $region11: #{tpu_custom_call.1} parent=5 // pred_region
        %s136 = ssub.s32 %s12, 1
        // Predicated region
        $region13: #{tpu_custom_call.1} parent=11 // pred_check
          %p137 = pneg %p45
        $region14: #{tpu_custom_call.1} parent=11 // pred_check_branch
          %139 = sbr.rel (%p137) target = $region16
        $region15: #{tpu_custom_call.1} parent=11 // pred_region
          _
        $region16: #{tpu_custom_call.1} parent=11 // pred_fallthru
          _
        // Predicated region
        $region17: #{tpu_custom_call.1} parent=11 // pred_check
          %p140 = pneg %p66
        $region18: #{tpu_custom_call.1} parent=11 // pred_check_branch
          %142 = sbr.rel (%p140) target = $region20
        $region19: #{tpu_custom_call.1} parent=11 // pred_region
          _
        $region20: #{tpu_custom_call.1} parent=11 // pred_fallthru
          _
      $region12: #{tpu_custom_call.1} parent=5 // pred_fallthru
        _
      %p143 = scmp.lt.s32.totalorder %s12, 2
      // Predicated region
      $region21: #{tpu_custom_call.1} parent=5 // pred_check
        %p144 = pneg %p143
      $region22: #{tpu_custom_call.1} parent=5 // pred_check_branch
        %146 = sbr.rel (%p144) target = $region24
      $region23: #{tpu_custom_call.1} parent=5 // pred_region
        // Predicated region
        $region25: #{tpu_custom_call.1} parent=23 // pred_check
          %p147 = pneg %p88
        $region26: #{tpu_custom_call.1} parent=23 // pred_check_branch
          %149 = sbr.rel (%p147) target = $region28
        $region27: #{tpu_custom_call.1} parent=23 // pred_region
          %s150 = smul.u32 2, %s20
          %p151 = scmp.lt.s32.totalorder %s19, 1
          %s152 = scalar_select %p151, %s19, 1
          %p153 = scmp.lt.s32.totalorder %s150, 1
          %s154 = scalar_select %p153, %s150, 1
          %s155 = smul.addr %s152, 2
          %s156 = sadd.s32 %s154, %s155
          %s157 = smul.addr %s156, 4
          %s158 = scalar_lea.vmem %s2, %s157
          %s159 = smul.u32 2, %s20
        $region28: #{tpu_custom_call.1} parent=23 // pred_fallthru
          _
      $region24: #{tpu_custom_call.1} parent=5 // pred_fallthru
        _
      %p160 = scmp.le.s32.totalorder 1, %s12
      %p161 = scmp.lt.s32.totalorder %s12, 3
      %p162 = pnand %p160, %p161
      %p163 = pneg %p162
      // Predicated region
      $region29: #{tpu_custom_call.1} parent=5 // pred_check
        _
      $region30: #{tpu_custom_call.1} parent=5 // pred_check_branch
        %165 = sbr.rel (%p162) target = $region32
      $region31: #{tpu_custom_call.1} parent=5 // pred_region
        %s166 = ssub.s32 %s12, 1
        %p167 = pneg %p45
        %p168 = pneg %p42
        %p169 = pneg %p66
        %p170 = pneg %p63
        %s171 = smul.u32 2, %s22
        %p172 = scmp.lt.s32.totalorder %s21, 1
        %s173 = scalar_select %p172, %s21, 1
        %p174 = scmp.lt.s32.totalorder %s171, 1
        %s175 = scalar_select %p174, %s171, 1
        %s176 = smul.addr %s173, 2
        %s177 = sadd.s32 %s175, %s176
        %s178 = smul.addr %s177, 4
        %s179 = scalar_lea.vmem %s2, %s178
        %p180 = pneg %p94
        %p181 = pneg %p91
        %p182 = pneg %p122
        %p183 = pneg %p119
        %s184 = sand.u32 %s109, 1
        %s185 = scalar_lea.sflag [#allocation3], %s184
        %s186 = sand.u32 %s109, 1
        %s187 = smul.addr %s186, 16
        %s188 = scalar_lea.vmem [#allocation2], %s187
        %s189 = smul.u32 2, %s22
        %p190 = scmp.lt.s32.totalorder %s21, 1
        %s191 = scalar_select %p190, %s21, 1
        %p192 = scmp.lt.s32.totalorder %s189, 1
        %s193 = scalar_select %p192, %s189, 1
        %s194 = smul.addr %s191, 2
        %s195 = sadd.s32 %s193, %s194
        %s196 = smul.addr %s195, 4
        %s197 = scalar_lea.vmem %s2, %s196
        %s198 = smul.u32 2, %s22
        %s199 = smul.u32 2, %s22
        %v200 = vld [vmem:[%s0] sm:$0xff]
        %v201 = vld [vmem:[%s197] sm:$0xff]
        %v202 = vld [vmem:[%s1] sm:$0xff]
        %204 = vset.pattern.permute.xlu0 0
        %205 = vperm.xlu0 %204, %v202
        %v206 = vpop.permute.xlu0 %205
        %209 = vst [vmem:[#allocation1] ss:$2 sm:$0xff] %v201
        %v210 = vld.sshfl [vmem:[#allocation1] sm:$0xff pattern:$0x75316420]
        %v211 = vld.sshfl [vmem:[#allocation1 + $0x8] sm:$0xff pattern:$0x75316420]
        %vm212 = vcmask 31744
        %v214 = vsel %vm212, %v200, 0
        %vm216 = vcmask 1043456
        %v217 = vsel %vm216, %v210, 0
        %v219 = vsel %vm216, %v211, 0
        %221 = vmatpush.msra.mxu0 0.0
        %222 = vmatpush.msra.mxu0 0.0
        %223 = vmatpush.msra.mxu0 0.0
        %224 = vmatpush.msra.mxu0 0.0
        %225 = vmatpush.msra.mxu0 0.0
        %226 = vmatpush.msra.mxu0 0.0
        %227 = vmatpush.msra.mxu0 0.0
        %228 = vmatpush.msra.mxu0 0.0
        %229 = vmatpush.msra.mxu0 0.0
        %230 = vmatpush.msra.mxu0 0.0
        %231 = vmatpush.msra.mxu0 0.0
        %232 = vmatpush.msra.mxu0 0.0
        %233 = vmatpush.msra.mxu0 0.0
        %234 = vmatpush.msra.mxu0 0.0
        %235 = vmatpush.msra.mxu0 0.0
        %v236 = vand.u32 %v217, 4294901760
        %237 = vmatpush.msra.mxu0 %v236
        %v238 = vand.u32 %v214, 4294901760
        %v239 = vsub.f32 %v214, %v238
        %v240 = vand.u32 %v239, 4294901760
        %v241 = vsub.f32 %v239, %v240
        %v242 = vand.u32 %v241, 4294901760
        %243 = vmatmul.f32.gmra.mxu0 %v242
        %v244 = vpop.f32.mrf.mxu0
        %v245 = vadd.f32 %v206, %v244
        %246 = vdwg.mxu0
        %247 = vmatpush.msra.mxu0 0.0
        %248 = vmatpush.msra.mxu0 0.0
        %249 = vmatpush.msra.mxu0 0.0
        %250 = vmatpush.msra.mxu0 0.0
        %251 = vmatpush.msra.mxu0 0.0
        %252 = vmatpush.msra.mxu0 0.0
        %253 = vmatpush.msra.mxu0 0.0
        %254 = vmatpush.msra.mxu0 0.0
        %255 = vmatpush.msra.mxu0 0.0
        %256 = vmatpush.msra.mxu0 0.0
        %257 = vmatpush.msra.mxu0 0.0
        %258 = vmatpush.msra.mxu0 0.0
        %259 = vmatpush.msra.mxu0 0.0
        %260 = vmatpush.msra.mxu0 0.0
        %261 = vmatpush.msra.mxu0 0.0
        %v262 = vand.u32 %v217, 4294901760
        %v263 = vsub.f32 %v217, %v262
        %v264 = vand.u32 %v263, 4294901760
        %v265 = vsub.f32 %v263, %v264
        %v266 = vand.u32 %v265, 4294901760
        %267 = vmatpush.msra.mxu0 %v266
        %v268 = vand.u32 %v214, 4294901760
        %269 = vmatmul.f32.gmra.mxu0 %v268
        %v270 = vpop.f32.mrf.mxu0
        %v271 = vadd.f32 %v245, %v270
        %272 = vdwg.mxu0
        %273 = vmatpush.msra.mxu0 0.0
        %274 = vmatpush.msra.mxu0 0.0
        %275 = vmatpush.msra.mxu0 0.0
        %276 = vmatpush.msra.mxu0 0.0
        %277 = vmatpush.msra.mxu0 0.0
        %278 = vmatpush.msra.mxu0 0.0
        %279 = vmatpush.msra.mxu0 0.0
        %280 = vmatpush.msra.mxu0 0.0
        %281 = vmatpush.msra.mxu0 0.0
        %282 = vmatpush.msra.mxu0 0.0
        %283 = vmatpush.msra.mxu0 0.0
        %284 = vmatpush.msra.mxu0 0.0
        %285 = vmatpush.msra.mxu0 0.0
        %286 = vmatpush.msra.mxu0 0.0
        %287 = vmatpush.msra.mxu0 0.0
        %v288 = vand.u32 %v217, 4294901760
        %v289 = vsub.f32 %v217, %v288
        %290 = vmatpush.msra.mxu0 %v289
        %v291 = vand.u32 %v214, 4294901760
        %v292 = vsub.f32 %v214, %v291
        %293 = vmatmul.f32.gmra.mxu0 %v292
        %v294 = vpop.f32.mrf.mxu0
        %v295 = vadd.f32 %v271, %v294
        %296 = vdwg.mxu0
        %297 = vmatpush.msra.mxu0 0.0
        %298 = vmatpush.msra.mxu0 0.0
        %299 = vmatpush.msra.mxu0 0.0
        %300 = vmatpush.msra.mxu0 0.0
        %301 = vmatpush.msra.mxu0 0.0
        %302 = vmatpush.msra.mxu0 0.0
        %303 = vmatpush.msra.mxu0 0.0
        %304 = vmatpush.msra.mxu0 0.0
        %305 = vmatpush.msra.mxu0 0.0
        %306 = vmatpush.msra.mxu0 0.0
        %307 = vmatpush.msra.mxu0 0.0
        %308 = vmatpush.msra.mxu0 0.0
        %309 = vmatpush.msra.mxu0 0.0
        %310 = vmatpush.msra.mxu0 0.0
        %311 = vmatpush.msra.mxu0 0.0
        %v312 = vand.u32 %v217, 4294901760
        %313 = vmatpush.msra.mxu0 %v312
        %v314 = vand.u32 %v214, 4294901760
        %v315 = vsub.f32 %v214, %v314
        %v316 = vand.u32 %v315, 4294901760
        %317 = vmatmul.f32.gmra.mxu0 %v316
        %v318 = vpop.f32.mrf.mxu0
        %v319 = vadd.f32 %v295, %v318
        %320 = vdwg.mxu0
        %321 = vmatpush.msra.mxu0 0.0
        %322 = vmatpush.msra.mxu0 0.0
        %323 = vmatpush.msra.mxu0 0.0
        %324 = vmatpush.msra.mxu0 0.0
        %325 = vmatpush.msra.mxu0 0.0
        %326 = vmatpush.msra.mxu0 0.0
        %327 = vmatpush.msra.mxu0 0.0
        %328 = vmatpush.msra.mxu0 0.0
        %329 = vmatpush.msra.mxu0 0.0
        %330 = vmatpush.msra.mxu0 0.0
        %331 = vmatpush.msra.mxu0 0.0
        %332 = vmatpush.msra.mxu0 0.0
        %333 = vmatpush.msra.mxu0 0.0
        %334 = vmatpush.msra.mxu0 0.0
        %335 = vmatpush.msra.mxu0 0.0
        %v336 = vand.u32 %v217, 4294901760
        %v337 = vsub.f32 %v217, %v336
        %v338 = vand.u32 %v337, 4294901760
        %339 = vmatpush.msra.mxu0 %v338
        %v340 = vand.u32 %v214, 4294901760
        %341 = vmatmul.f32.gmra.mxu0 %v340
        %v342 = vpop.f32.mrf.mxu0
        %v343 = vadd.f32 %v319, %v342
        %344 = vdwg.mxu0
        %345 = vmatpush.msra.mxu0 0.0
        %346 = vmatpush.msra.mxu0 0.0
        %347 = vmatpush.msra.mxu0 0.0
        %348 = vmatpush.msra.mxu0 0.0
        %349 = vmatpush.msra.mxu0 0.0
        %350 = vmatpush.msra.mxu0 0.0
        %351 = vmatpush.msra.mxu0 0.0
        %352 = vmatpush.msra.mxu0 0.0
        %353 = vmatpush.msra.mxu0 0.0
        %354 = vmatpush.msra.mxu0 0.0
        %355 = vmatpush.msra.mxu0 0.0
        %356 = vmatpush.msra.mxu0 0.0
        %357 = vmatpush.msra.mxu0 0.0
        %358 = vmatpush.msra.mxu0 0.0
        %359 = vmatpush.msra.mxu0 0.0
        %v360 = vand.u32 %v217, 4294901760
        %361 = vmatpush.msra.mxu0 %v360
        %v362 = vand.u32 %v214, 4294901760
        %363 = vmatmul.f32.gmra.mxu0 %v362
        %v364 = vpop.f32.mrf.mxu0
        %v365 = vadd.f32 %v343, %v364
        %366 = vdwg.mxu0
        %367 = vmatpush.msra.mxu0 0.0
        %368 = vmatpush.msra.mxu0 0.0
        %369 = vmatpush.msra.mxu0 0.0
        %370 = vmatpush.msra.mxu0 0.0
        %371 = vmatpush.msra.mxu0 0.0
        %372 = vmatpush.msra.mxu0 0.0
        %373 = vmatpush.msra.mxu0 0.0
        %374 = vmatpush.msra.mxu0 0.0
        %375 = vmatpush.msra.mxu0 0.0
        %376 = vmatpush.msra.mxu0 0.0
        %377 = vmatpush.msra.mxu0 0.0
        %378 = vmatpush.msra.mxu0 0.0
        %379 = vmatpush.msra.mxu0 0.0
        %380 = vmatpush.msra.mxu0 0.0
        %381 = vmatpush.msra.mxu0 0.0
        %v382 = vand.u32 %v219, 4294901760
        %383 = vmatpush.msra.mxu0 %v382
        %v384 = vand.u32 %v214, 4294901760
        %v385 = vsub.f32 %v214, %v384
        %v386 = vand.u32 %v385, 4294901760
        %v387 = vsub.f32 %v385, %v386
        %v388 = vand.u32 %v387, 4294901760
        %389 = vmatmul.f32.gmra.mxu0 %v388
        %v390 = vpop.f32.mrf.mxu0
        %v391 = vadd.f32 %v206, %v390
        %392 = vdwg.mxu0
        %393 = vmatpush.msra.mxu0 0.0
        %394 = vmatpush.msra.mxu0 0.0
        %395 = vmatpush.msra.mxu0 0.0
        %396 = vmatpush.msra.mxu0 0.0
        %397 = vmatpush.msra.mxu0 0.0
        %398 = vmatpush.msra.mxu0 0.0
        %399 = vmatpush.msra.mxu0 0.0
        %400 = vmatpush.msra.mxu0 0.0
        %401 = vmatpush.msra.mxu0 0.0
        %402 = vmatpush.msra.mxu0 0.0
        %403 = vmatpush.msra.mxu0 0.0
        %404 = vmatpush.msra.mxu0 0.0
        %405 = vmatpush.msra.mxu0 0.0
        %406 = vmatpush.msra.mxu0 0.0
        %407 = vmatpush.msra.mxu0 0.0
        %v408 = vand.u32 %v219, 4294901760
        %v409 = vsub.f32 %v219, %v408
        %v410 = vand.u32 %v409, 4294901760
        %v411 = vsub.f32 %v409, %v410
        %v412 = vand.u32 %v411, 4294901760
        %413 = vmatpush.msra.mxu0 %v412
        %v414 = vand.u32 %v214, 4294901760
        %415 = vmatmul.f32.gmra.mxu0 %v414
        %v416 = vpop.f32.mrf.mxu0
        %v417 = vadd.f32 %v391, %v416
        %418 = vdwg.mxu0
        %419 = vmatpush.msra.mxu0 0.0
        %420 = vmatpush.msra.mxu0 0.0
        %421 = vmatpush.msra.mxu0 0.0
        %422 = vmatpush.msra.mxu0 0.0
        %423 = vmatpush.msra.mxu0 0.0
        %424 = vmatpush.msra.mxu0 0.0
        %425 = vmatpush.msra.mxu0 0.0
        %426 = vmatpush.msra.mxu0 0.0
        %427 = vmatpush.msra.mxu0 0.0
        %428 = vmatpush.msra.mxu0 0.0
        %429 = vmatpush.msra.mxu0 0.0
        %430 = vmatpush.msra.mxu0 0.0
        %431 = vmatpush.msra.mxu0 0.0
        %432 = vmatpush.msra.mxu0 0.0
        %433 = vmatpush.msra.mxu0 0.0
        %v434 = vand.u32 %v219, 4294901760
        %v435 = vsub.f32 %v219, %v434
        %436 = vmatpush.msra.mxu0 %v435
        %v437 = vand.u32 %v214, 4294901760
        %v438 = vsub.f32 %v214, %v437
        %439 = vmatmul.f32.gmra.mxu0 %v438
        %v440 = vpop.f32.mrf.mxu0
        %v441 = vadd.f32 %v417, %v440
        %442 = vdwg.mxu0
        %443 = vmatpush.msra.mxu0 0.0
        %444 = vmatpush.msra.mxu0 0.0
        %445 = vmatpush.msra.mxu0 0.0
        %446 = vmatpush.msra.mxu0 0.0
        %447 = vmatpush.msra.mxu0 0.0
        %448 = vmatpush.msra.mxu0 0.0
        %449 = vmatpush.msra.mxu0 0.0
        %450 = vmatpush.msra.mxu0 0.0
        %451 = vmatpush.msra.mxu0 0.0
        %452 = vmatpush.msra.mxu0 0.0
        %453 = vmatpush.msra.mxu0 0.0
        %454 = vmatpush.msra.mxu0 0.0
        %455 = vmatpush.msra.mxu0 0.0
        %456 = vmatpush.msra.mxu0 0.0
        %457 = vmatpush.msra.mxu0 0.0
        %v458 = vand.u32 %v219, 4294901760
        %459 = vmatpush.msra.mxu0 %v458
        %v460 = vand.u32 %v214, 4294901760
        %v461 = vsub.f32 %v214, %v460
        %v462 = vand.u32 %v461, 4294901760
        %463 = vmatmul.f32.gmra.mxu0 %v462
        %v464 = vpop.f32.mrf.mxu0
        %v465 = vadd.f32 %v441, %v464
        %466 = vdwg.mxu0
        %467 = vmatpush.msra.mxu0 0.0
        %468 = vmatpush.msra.mxu0 0.0
        %469 = vmatpush.msra.mxu0 0.0
        %470 = vmatpush.msra.mxu0 0.0
        %471 = vmatpush.msra.mxu0 0.0
        %472 = vmatpush.msra.mxu0 0.0
        %473 = vmatpush.msra.mxu0 0.0
        %474 = vmatpush.msra.mxu0 0.0
        %475 = vmatpush.msra.mxu0 0.0
        %476 = vmatpush.msra.mxu0 0.0
        %477 = vmatpush.msra.mxu0 0.0
        %478 = vmatpush.msra.mxu0 0.0
        %479 = vmatpush.msra.mxu0 0.0
        %480 = vmatpush.msra.mxu0 0.0
        %481 = vmatpush.msra.mxu0 0.0
        %v482 = vand.u32 %v219, 4294901760
        %v483 = vsub.f32 %v219, %v482
        %v484 = vand.u32 %v483, 4294901760
        %485 = vmatpush.msra.mxu0 %v484
        %v486 = vand.u32 %v214, 4294901760
        %487 = vmatmul.f32.gmra.mxu0 %v486
        %v488 = vpop.f32.mrf.mxu0
        %v489 = vadd.f32 %v465, %v488
        %490 = vdwg.mxu0
        %491 = vmatpush.msra.mxu0 0.0
        %492 = vmatpush.msra.mxu0 0.0
        %493 = vmatpush.msra.mxu0 0.0
        %494 = vmatpush.msra.mxu0 0.0
        %495 = vmatpush.msra.mxu0 0.0
        %496 = vmatpush.msra.mxu0 0.0
        %497 = vmatpush.msra.mxu0 0.0
        %498 = vmatpush.msra.mxu0 0.0
        %499 = vmatpush.msra.mxu0 0.0
        %500 = vmatpush.msra.mxu0 0.0
        %501 = vmatpush.msra.mxu0 0.0
        %502 = vmatpush.msra.mxu0 0.0
        %503 = vmatpush.msra.mxu0 0.0
        %504 = vmatpush.msra.mxu0 0.0
        %505 = vmatpush.msra.mxu0 0.0
        %v506 = vand.u32 %v219, 4294901760
        %507 = vmatpush.msra.mxu0 %v506
        %v508 = vand.u32 %v214, 4294901760
        %509 = vmatmul.f32.gmra.mxu0 %v508
        %v510 = vpop.f32.mrf.mxu0
        %v511 = vadd.f32 %v489, %v510
        %512 = vdwg.mxu0
        %v513 = vmax.f32 %v365, 0.0
        %v514 = vmax.f32 %v511, 0.0
        %515 = vst [vmem:[%s188] sm:$0xff] %v513
        %516 = vst [vmem:[%s188 + $0x8] sm:$0xff] %v514
        %s517 = sand.u32 %s109, 1
        %s518 = scalar_lea.sflag [#allocation3], %s517
        %s519 = sand.u32 %s109, 1
        %s520 = smul.addr %s519, 16
        %s521 = scalar_lea.vmem [#allocation2], %s520
        // Predicated region
        $region33: #{tpu_custom_call.1} parent=31 // pred_check
          %p522 = pneg %p119
        $region34: #{tpu_custom_call.1} parent=31 // pred_check_branch
          %524 = sbr.rel (%p522) target = $region36
        $region35: #{tpu_custom_call.1} parent=31 // pred_region
          %s525 = smul.u32 2, %s22
          %527 = vsyncadd %s518, 0
          %s528 = smul.addr %s21, 2
          %s529 = sadd.s32 %s525, %s528
          %s530 = smul.addr %s529, 8
          %s531 = scalar_lea.hbm %s3, %s530
          %s533 = sshll.u32 %s521, 4
          %s534 = int_to_ptr.vmem [resolvable:$true] %s533
          %s535 = sshll.u32 %s531, 4
          %s536 = int_to_ptr.hbm [resolvable:$true] %s535
          %538 = dma.vmem_to_hbm [thread:$0]  %s534, 256, %s536, %s518
        $region36: #{tpu_custom_call.1} parent=31 // pred_fallthru
          _
      $region32: #{tpu_custom_call.1} parent=5 // pred_fallthru
        _
      %p539 = scmp.le.s32.totalorder 2, %s12
      // Predicated region
      $region37: #{tpu_custom_call.1} parent=5 // pred_check
        %p540 = pneg %p539
      $region38: #{tpu_custom_call.1} parent=5 // pred_check_branch
        %542 = sbr.rel (%p540) target = $region40
      $region39: #{tpu_custom_call.1} parent=5 // pred_region
        %s543 = ssub.s32 %s12, 2
        // Predicated region
        $region41: #{tpu_custom_call.1} parent=39 // pred_check
          %p544 = pneg %p125
        $region42: #{tpu_custom_call.1} parent=39 // pred_check_branch
          %546 = sbr.rel (%p544) target = $region44
        $region43: #{tpu_custom_call.1} parent=39 // pred_region
          %s547 = sand.u32 %s110, 1
          %s548 = scalar_lea.sflag [#allocation3], %s547
          %s549 = sand.u32 %s110, 1
          %s550 = smul.addr %s549, 16
          %s551 = scalar_lea.vmem [#allocation2], %s550
          %553 = dma.done %s548, 256
        $region44: #{tpu_custom_call.1} parent=39 // pred_fallthru
          _
      $region40: #{tpu_custom_call.1} parent=5 // pred_fallthru
        _
    $region6: #{tpu_custom_call.1} parent=1 // loop_footer
      %s16 = sadd.s32 1, %s12
    $region7: #{tpu_custom_call.1} parent=1 // loop_footer_branch
      %11 = sbr.rel target = $region3
    $region8: #{tpu_custom_call.1} parent=1 // loop_exit
      _
    %554 = vsyncpa [#allocation3], 1
    %s555 = scalar_lea.sflag [#allocation3], 1
    %556 = vsyncpa %s555, 1

</llo_original>
